<compile_context>
chip_gen: v6e
topology: v6e:2x2x1
jax: 0.10.0
libtpu: 0.0.40
codegen_flags: <defaults>
</compile_context>

<pallas_src>
import functools

import jax
import jax.numpy as jnp
from jax.experimental import pallas as pl
from jax.experimental.pallas import tpu as pltpu


def gather_kernel(idx_ref, table_hbm, out_ref, sem, *, ring):
    """One grid step = one token tile.

    idx_ref:   (T_pad,)     int32  (SMEM, scalar-prefetched) flat token indices
    table_hbm: (N, D_pad)   f32    raw HBM ref (memory_space=pl.ANY), never auto-DMA'd
    out_ref:   (tt, D_pad)  f32    VMEM output block for this token tile
    sem:       (ring,)      DMA semaphores — ring of in-flight row copies
    """
    i = pl.program_id(0)
    tt = out_ref.shape[0]

    def start_row(t):
        row = idx_ref[i * tt + t]
        pltpu.make_async_copy(
            table_hbm.at[pl.ds(row, 1), :],      # one embedding row in HBM
            out_ref.at[pl.ds(t, 1), :],          # straight into the output block
            sem.at[t % ring],
        ).start()

    def wait_row(t):
        pltpu.make_async_copy(
            table_hbm.at[pl.ds(0, 1), :],        # src index irrelevant for wait (shape only)
            out_ref.at[pl.ds(t, 1), :],
            sem.at[t % ring],
        ).wait()

    # Prime the ring with the first `ring` row copies.
    @pl.loop(0, ring)
    def _(t):
        start_row(t)

    # Steady state: wait for the oldest in-flight copy, reuse its slot for the next row.
    if tt > ring:
        @pl.loop(ring, tt)
        def _(t):
            wait_row(t - ring)
            start_row(t)

    # Drain the remaining in-flight copies before the block is written back.
    @pl.loop(tt - ring, tt)
    def _(t):
        wait_row(t)


def _round_up(x, m):
    return (x + m - 1) // m * m


def logging_embedding(indices, table, access_counts, *, token_tile=256, dma_ring=8):
    """Functional equivalent of LoggingEmbedding.forward.

    Returns (embeddings, new_access_counts).
    """
    orig_shape = indices.shape
    flat = indices.reshape(-1).astype(jnp.int32)
    T = flat.shape[0]
    N, D = table.shape

    # 8-aligned token tile (clamped for tiny inputs), lane-dense (128-aligned) embedding dim.
    tt = _round_up(min(token_tile, _round_up(T, 8)), 8)
    T_pad = _round_up(T, tt)
    D_pad = _round_up(D, 128)
    n_tok = T_pad // tt
    ring = max(1, min(dma_ring, tt))

    # Padding tokens get index 0: they DMA a valid row (row 0) that is sliced off below,
    # and they never enter the histogram (bincount runs on the unpadded indices).
    idx_p = flat
    if T_pad != T:
        idx_p = jnp.concatenate([flat, jnp.zeros((T_pad - T,), jnp.int32)])
    table_p = table
    if D_pad != D:
        table_p = jnp.pad(table, ((0, 0), (0, D_pad - D)))

    itemsize = jnp.dtype(table.dtype).itemsize
    # Only the output block is pipelined (double-buffered); the table lives in HBM.
    vmem_needed = 2 * tt * D_pad * itemsize + (2 << 20)
    vmem_limit = min(max(vmem_needed, 32 << 20), 64 << 20)   # cap at v7x physical VMEM

    out = pl.pallas_call(
        functools.partial(gather_kernel, ring=ring),
        out_shape=jax.ShapeDtypeStruct((T_pad, D_pad), table.dtype),
        grid_spec=pltpu.PrefetchScalarGridSpec(
            num_scalar_prefetch=1,                      # flat indices -> SMEM
            grid=(n_tok,),
            in_specs=[
                pl.BlockSpec(memory_space=pl.ANY),      # table stays in HBM, manual DMA
            ],
            out_specs=pl.BlockSpec((tt, D_pad), lambda i, idx: (i, 0)),
            scratch_shapes=[pltpu.SemaphoreType.DMA((ring,))],
        ),
        compiler_params=pltpu.CompilerParams(
            dimension_semantics=("parallel",),          # token tiles are independent (v7x megacore)
            vmem_limit_bytes=vmem_limit,
        ),
        cost_estimate=pl.CostEstimate(
            flops=0,
            transcendentals=0,
            bytes_accessed=2 * T_pad * D_pad * itemsize + T_pad * 4,
        ),
    )(idx_p, table_p)

    emb = out[:T, :D].reshape(*orig_shape, D)

    # Access-count histogram: O(T) scatter-add, done in plain JAX (exact, int).
    delta = jnp.bincount(flat, length=N).astype(access_counts.dtype)
    new_counts = access_counts + delta
    return emb, new_counts


if __name__ == "__main__":
    key = jax.random.PRNGKey(0)
    k_tbl, k_idx = jax.random.split(key)

    num_embeddings = 64
    embedding_dim = 32
    batch, seq = 2, 8

    # nn.Embedding default init: N(0, 1)
    table = jax.random.normal(k_tbl, (num_embeddings, embedding_dim), dtype=jnp.float32)
    # module state: self.access_counts = zeros(num_embeddings) (int32 instead of int64)
    access_counts = jnp.zeros((num_embeddings,), dtype=jnp.int32)

    indices = jax.random.randint(k_idx, (batch, seq), 0, num_embeddings, dtype=jnp.int32)

    emb, new_counts = logging_embedding(indices, table, access_counts)
    emb = jax.block_until_ready(emb)
    new_counts = jax.block_until_ready(new_counts)

    # Reference check (plain JAX): gather + scatter-add histogram (independent of bincount).
    ref_emb = jnp.take(table, indices, axis=0)
    ref_counts = access_counts + jnp.zeros((num_embeddings,), jnp.int32).at[
        indices.reshape(-1)].add(1)

    assert emb.shape == (batch, seq, embedding_dim)
    assert jnp.allclose(emb, ref_emb, atol=0.0), "embedding gather mismatch"
    assert jnp.array_equal(new_counts, ref_counts), "access count mismatch"

    print("KERNEL_OK")
</pallas_src>

<mosaic_0001>
module attributes {stable_mosaic.version = 11 : i64} {
  func.func @gather_kernel(%arg0: i32, %arg1: memref<16xi32, #tpu.memory_space<smem>>, %arg2: memref<64x128xf32, #tpu.memory_space<any>>, %arg3: memref<16x128xf32, #tpu.memory_space<vmem>>, %arg4: memref<8x!tpu.dma_semaphore, #tpu.memory_space<semaphore_mem>>) attributes {dimension_semantics = [#tpu.dimension_semantics<parallel>], iteration_bounds = array<i64: 1>, scalar_prefetch = 1 : i64, scratch_operands = 1 : i64, tpu.core_type = #tpu.core_type<tc>, window_params = [{}, {transform_indices = @transform_1, window_bounds = array<i64: 16, 128>}]} {
    %c0_i32 = arith.constant 0 : i32
    %c8_i32 = arith.constant 8 : i32
    %0 = arith.addi %c0_i32, %c8_i32 : i32
    %c1_i32 = arith.constant 1 : i32
    scf.for %arg5 = %c0_i32 to %0 step %c1_i32  : i32 {
      %c1_i32_9 = arith.constant 1 : i32
      %3 = arith.muli %arg5, %c1_i32_9 : i32
      %c0_i32_10 = arith.constant 0 : i32
      %4 = arith.addi %c0_i32_10, %3 : i32
      %c16_i32 = arith.constant 16 : i32
      %5 = arith.muli %arg0, %c16_i32 : i32
      %6 = arith.addi %5, %4 : i32
      %7 = arith.index_cast %6 : i32 to index
      %8 = memref.load %arg1[%7] : memref<16xi32, #tpu.memory_space<smem>>
      %c8_i32_11 = arith.constant 8 : i32
      %c0_i32_12 = arith.constant 0 : i32
      %9 = arith.cmpi eq, %c8_i32_11, %c0_i32_12 : i32
      %c1_i32_13 = arith.constant 1 : i32
      %10 = arith.select %9, %c1_i32_13, %c8_i32_11 : i32
      %11 = arith.remsi %4, %10 : i32
      %c0_i32_14 = arith.constant 0 : i32
      %12 = arith.cmpi ne, %11, %c0_i32_14 : i32
      %c0_i32_15 = arith.constant 0 : i32
      %13 = arith.cmpi slt, %11, %c0_i32_15 : i32
      %c0_i32_16 = arith.constant 0 : i32
      %14 = arith.cmpi slt, %10, %c0_i32_16 : i32
      %15 = arith.xori %13, %14 : i1
      %16 = arith.andi %15, %12 : i1
      %17 = arith.addi %11, %10 : i32
      %18 = arith.select %16, %17, %11 : i32
      %c0_i32_17 = arith.constant 0 : i32
      %19 = tpu.memref_slice %arg2[%8, %c0_i32_17] : memref<64x128xf32, #tpu.memory_space<any>> -> memref<1x128xf32, #tpu.memory_space<any>>
      %c0_i32_18 = arith.constant 0 : i32
      %20 = tpu.memref_slice %arg3[%4, %c0_i32_18] : memref<16x128xf32, #tpu.memory_space<vmem>> -> memref<1x128xf32, #tpu.memory_space<vmem>>
      %21 = tpu.memref_slice %arg4[%18] : memref<8x!tpu.dma_semaphore, #tpu.memory_space<semaphore_mem>> -> memref<1x!tpu.dma_semaphore, #tpu.memory_space<semaphore_mem>>
      %22 = tpu.memref_squeeze %21 : memref<1x!tpu.dma_semaphore, #tpu.memory_space<semaphore_mem>> -> memref<!tpu.dma_semaphore, #tpu.memory_space<semaphore_mem>>
      tpu.enqueue_dma source(%19 : memref<1x128xf32, #tpu.memory_space<any>>) target(%20 : memref<1x128xf32, #tpu.memory_space<vmem>>) target_semaphore(%22 : memref<!tpu.dma_semaphore, #tpu.memory_space<semaphore_mem>>)
    }
    %c8_i32_0 = arith.constant 8 : i32
    %c0_i32_1 = arith.constant 0 : i32
    %c8_i32_2 = arith.constant 8 : i32
    %1 = arith.addi %c0_i32_1, %c8_i32_2 : i32
    %c1_i32_3 = arith.constant 1 : i32
    scf.for %arg5 = %c0_i32_1 to %1 step %c1_i32_3  : i32 {
      %c1_i32_9 = arith.constant 1 : i32
      %3 = arith.muli %arg5, %c1_i32_9 : i32
      %c8_i32_10 = arith.constant 8 : i32
      %4 = arith.addi %c8_i32_10, %3 : i32
      %c8_i32_11 = arith.constant 8 : i32
      %5 = arith.subi %4, %c8_i32_11 : i32
      %c8_i32_12 = arith.constant 8 : i32
      %c0_i32_13 = arith.constant 0 : i32
      %6 = arith.cmpi eq, %c8_i32_12, %c0_i32_13 : i32
      %c1_i32_14 = arith.constant 1 : i32
      %7 = arith.select %6, %c1_i32_14, %c8_i32_12 : i32
      %8 = arith.remsi %5, %7 : i32
      %c0_i32_15 = arith.constant 0 : i32
      %9 = arith.cmpi ne, %8, %c0_i32_15 : i32
      %c0_i32_16 = arith.constant 0 : i32
      %10 = arith.cmpi slt, %8, %c0_i32_16 : i32
      %c0_i32_17 = arith.constant 0 : i32
      %11 = arith.cmpi slt, %7, %c0_i32_17 : i32
      %12 = arith.xori %10, %11 : i1
      %13 = arith.andi %12, %9 : i1
      %14 = arith.addi %8, %7 : i32
      %15 = arith.select %13, %14, %8 : i32
      %c0_i32_18 = arith.constant 0 : i32
      %c0_i32_19 = arith.constant 0 : i32
      %16 = tpu.memref_slice %arg2[%c0_i32_18, %c0_i32_19] : memref<64x128xf32, #tpu.memory_space<any>> -> memref<1x128xf32, #tpu.memory_space<any>>
      %c0_i32_20 = arith.constant 0 : i32
      %17 = tpu.memref_slice %arg3[%5, %c0_i32_20] : memref<16x128xf32, #tpu.memory_space<vmem>> -> memref<1x128xf32, #tpu.memory_space<vmem>>
      %18 = tpu.memref_slice %arg4[%15] : memref<8x!tpu.dma_semaphore, #tpu.memory_space<semaphore_mem>> -> memref<1x!tpu.dma_semaphore, #tpu.memory_space<semaphore_mem>>
      %19 = tpu.memref_squeeze %18 : memref<1x!tpu.dma_semaphore, #tpu.memory_space<semaphore_mem>> -> memref<!tpu.dma_semaphore, #tpu.memory_space<semaphore_mem>>
      tpu.wait_dma2 semaphore(%19 : memref<!tpu.dma_semaphore, #tpu.memory_space<semaphore_mem>>) src(%16 : memref<1x128xf32, #tpu.memory_space<any>>) dst(%17 : memref<1x128xf32, #tpu.memory_space<vmem>>)
      %c16_i32 = arith.constant 16 : i32
      %20 = arith.muli %arg0, %c16_i32 : i32
      %21 = arith.addi %20, %4 : i32
      %22 = arith.index_cast %21 : i32 to index
      %23 = memref.load %arg1[%22] : memref<16xi32, #tpu.memory_space<smem>>
      %c8_i32_21 = arith.constant 8 : i32
      %c0_i32_22 = arith.constant 0 : i32
      %24 = arith.cmpi eq, %c8_i32_21, %c0_i32_22 : i32
      %c1_i32_23 = arith.constant 1 : i32
      %25 = arith.select %24, %c1_i32_23, %c8_i32_21 : i32
      %26 = arith.remsi %4, %25 : i32
      %c0_i32_24 = arith.constant 0 : i32
      %27 = arith.cmpi ne, %26, %c0_i32_24 : i32
      %c0_i32_25 = arith.constant 0 : i32
      %28 = arith.cmpi slt, %26, %c0_i32_25 : i32
      %c0_i32_26 = arith.constant 0 : i32
      %29 = arith.cmpi slt, %25, %c0_i32_26 : i32
      %30 = arith.xori %28, %29 : i1
      %31 = arith.andi %30, %27 : i1
      %32 = arith.addi %26, %25 : i32
      %33 = arith.select %31, %32, %26 : i32
      %c0_i32_27 = arith.constant 0 : i32
      %34 = tpu.memref_slice %arg2[%23, %c0_i32_27] : memref<64x128xf32, #tpu.memory_space<any>> -> memref<1x128xf32, #tpu.memory_space<any>>
      %c0_i32_28 = arith.constant 0 : i32
      %35 = tpu.memref_slice %arg3[%4, %c0_i32_28] : memref<16x128xf32, #tpu.memory_space<vmem>> -> memref<1x128xf32, #tpu.memory_space<vmem>>
      %36 = tpu.memref_slice %arg4[%33] : memref<8x!tpu.dma_semaphore, #tpu.memory_space<semaphore_mem>> -> memref<1x!tpu.dma_semaphore, #tpu.memory_space<semaphore_mem>>
      %37 = tpu.memref_squeeze %36 : memref<1x!tpu.dma_semaphore, #tpu.memory_space<semaphore_mem>> -> memref<!tpu.dma_semaphore, #tpu.memory_space<semaphore_mem>>
      tpu.enqueue_dma source(%34 : memref<1x128xf32, #tpu.memory_space<any>>) target(%35 : memref<1x128xf32, #tpu.memory_space<vmem>>) target_semaphore(%37 : memref<!tpu.dma_semaphore, #tpu.memory_space<semaphore_mem>>)
    }
    %c8_i32_4 = arith.constant 8 : i32
    %c0_i32_5 = arith.constant 0 : i32
    %c8_i32_6 = arith.constant 8 : i32
    %2 = arith.addi %c0_i32_5, %c8_i32_6 : i32
    %c1_i32_7 = arith.constant 1 : i32
    scf.for %arg5 = %c0_i32_5 to %2 step %c1_i32_7  : i32 {
      %c1_i32_9 = arith.constant 1 : i32
      %3 = arith.muli %arg5, %c1_i32_9 : i32
      %c8_i32_10 = arith.constant 8 : i32
      %4 = arith.addi %c8_i32_10, %3 : i32
      %c8_i32_11 = arith.constant 8 : i32
      %c0_i32_12 = arith.constant 0 : i32
      %5 = arith.cmpi eq, %c8_i32_11, %c0_i32_12 : i32
      %c1_i32_13 = arith.constant 1 : i32
      %6 = arith.select %5, %c1_i32_13, %c8_i32_11 : i32
      %7 = arith.remsi %4, %6 : i32
      %c0_i32_14 = arith.constant 0 : i32
      %8 = arith.cmpi ne, %7, %c0_i32_14 : i32
      %c0_i32_15 = arith.constant 0 : i32
      %9 = arith.cmpi slt, %7, %c0_i32_15 : i32
      %c0_i32_16 = arith.constant 0 : i32
      %10 = arith.cmpi slt, %6, %c0_i32_16 : i32
      %11 = arith.xori %9, %10 : i1
      %12 = arith.andi %11, %8 : i1
      %13 = arith.addi %7, %6 : i32
      %14 = arith.select %12, %13, %7 : i32
      %c0_i32_17 = arith.constant 0 : i32
      %c0_i32_18 = arith.constant 0 : i32
      %15 = tpu.memref_slice %arg2[%c0_i32_17, %c0_i32_18] : memref<64x128xf32, #tpu.memory_space<any>> -> memref<1x128xf32, #tpu.memory_space<any>>
      %c0_i32_19 = arith.constant 0 : i32
      %16 = tpu.memref_slice %arg3[%4, %c0_i32_19] : memref<16x128xf32, #tpu.memory_space<vmem>> -> memref<1x128xf32, #tpu.memory_space<vmem>>
      %17 = tpu.memref_slice %arg4[%14] : memref<8x!tpu.dma_semaphore, #tpu.memory_space<semaphore_mem>> -> memref<1x!tpu.dma_semaphore, #tpu.memory_space<semaphore_mem>>
      %18 = tpu.memref_squeeze %17 : memref<1x!tpu.dma_semaphore, #tpu.memory_space<semaphore_mem>> -> memref<!tpu.dma_semaphore, #tpu.memory_space<semaphore_mem>>
      tpu.wait_dma2 semaphore(%18 : memref<!tpu.dma_semaphore, #tpu.memory_space<semaphore_mem>>) src(%15 : memref<1x128xf32, #tpu.memory_space<any>>) dst(%16 : memref<1x128xf32, #tpu.memory_space<vmem>>)
    }
    %c8_i32_8 = arith.constant 8 : i32
    return
  }
  func.func @transform_1(%arg0: i32, %arg1: memref<16xi32, #tpu.memory_space<smem>>) -> (i32, i32) {
    %c0_i32 = arith.constant 0 : i32
    %c0_i32_0 = arith.constant 0 : i32
    return %arg0, %c0_i32 : i32, i32
  }
}

</mosaic_0001>

<llo_original>
// kernel: tpu_custom_call.1
$region0: #{tpu_custom_call.1}
  #allocation0 [shape = 'u32[]', space=smem, size = 0x4, offset = 0x4, fixed_abs, tag = 'smem constant byte address 0x4 - core index']
  #allocation1 [shape = 'u32[144,128]{1,0:T(1,128)}', space=vmem, size = 0x12000, scoped, tag = 'internal scratch']
  #allocation2 [shape = 's32[8]{0}', space=sflag, size = 0x20, scoped, tag = 'scratch operand']
  #allocation3 [shape = 's32[1]{0}', space=sflag, size = 0x4, scoped, tag = 'scoped memory for tpu_custom_call.1']
  #allocation4 [shape = 'u8[512]{0}', space=smem, size = 0x200, scoped, tag = 'prefetched SMEM operand 0']
  #allocation7 [shape = 's32[]', space=sflag, size = 0x4, offset = 0, fixed_abs, tag = 'sflag constant byte address 0x0 - dummy sync flag']
  #allocation8 [shape = 's32[]', space=sflag, size = 0x4, offset = 0, fixed_abs, tag = 'sflag constant byte address 0x0 - dummy sync flag']
  #allocation9 [shape = 'u32[]', space=smem, size = 0x4, offset = 0x44, fixed_abs, tag = 'smem constant byte address 0x44 - assertion arg 0']
  #allocation10 [shape = 'u32[]', space=smem, size = 0x4, offset = 0x48, fixed_abs, tag = 'smem constant byte address 0x48 - assertion arg 1']
  #allocation11 [shape = 's32[]', space=sflag, size = 0x4, offset = 0, fixed_abs, tag = 'sflag constant byte address 0x0 - dummy sync flag']
  #allocation12 [shape = 's32[]', space=sflag, size = 0x4, offset = 0, fixed_abs, tag = 'sflag constant byte address 0x0 - dummy sync flag']
  %s0 = inlined_call_operand.hbm [shape: s32[16], index: 0, kind: input, shape index: {}]
  %s1 = inlined_call_operand.hbm [shape: f32[64,128], index: 1, kind: input, shape index: {}]
  %s2 = inlined_call_operand.hbm [shape: f32[16,128], index: 2, kind: output, shape index: {}]
  %s3 = sld [smem:[#allocation0]]
  $region39: #{tpu_custom_call.1} parent=0
    _
  %s5 = ssub.s32 1, %s3
  %s6 = scalar_select 0, %s5, %s3
  %8 = dma.hbm_to_smem %s0, 16, [#allocation4], [#allocation3]
  %9 = dma.done [#allocation3], 16
  %10 = sfence
  $region1: #{tpu_custom_call.1} parent=0
    #allocation5 [shape = 'u8[8192]{0}', space=vmem, size = 0x2000, scoped, tag = 'output window, operand 0, single buffered']
    #allocation6 [shape = 's32[1]{0}', space=sflag, size = 0x4, scoped, tag = 'scoped memory for tpu_custom_call.1']
    %11 = vsyncpa [#allocation6], 0
    loop: start=0, step=1, limit=8
    $region2: #{tpu_custom_call.1} parent=1 // loop_pre_header
      _
    $region3: #{tpu_custom_call.1} parent=1 // loop_header
      %s13 = sphi 0, %s17
      %p14 = scmp.ge.s32.totalorder %s13, 8
    $region4: #{tpu_custom_call.1} parent=1 // loop_header_branch
      %16 = sbr.rel (%p14) target = $region8
    $region5: #{tpu_custom_call.1} parent=1 // loop_body
      %s18 = smul.u32 0, 16
      %s19 = sadd.s32 %s18, %s13
      %s20 = sld [smem:[#allocation4 + %s19]]
      %p21 = scmp.lt.s32.totalorder %s13, 0
      %s22 = ssub.s32 0, %s13
      %s23 = scalar_select %p21, %s22, %s13
      %s24 = sand.u32 %s23, 7
      %s25 = ssub.s32 0, %s24
      %s26 = scalar_select %p21, %s25, %s24
      %p27 = scmp.ne.s32.totalorder %s26, 0
      %p28 = scmp.lt.s32.totalorder %s26, 0
      %p29 = pnand %p28, %p27
      %p30 = pneg %p29
      %s31 = sadd.s32 %s26, 8
      %s32 = scalar_select %p30, %s31, %s26
      %s33 = smul.addr %s20, 16
      %s34 = scalar_lea.hbm %s1, %s33
      %s35 = scalar_lea.vmem [#allocation5], %s13
      %s36 = scalar_lea.sflag [#allocation2], %s32
      // Predicated region
      $region9: #{tpu_custom_call.1} parent=5 // pred_check
        _
      $region10: #{tpu_custom_call.1} parent=5 // pred_check_branch
        %38 = sbr.rel target = $region12
      $region11: #{tpu_custom_call.1} parent=5 // pred_region
        %39 = sst [smem:[#allocation9]] [#allocation8]
        %40 = sst [smem:[#allocation10]] [#allocation7]
      $region12: #{tpu_custom_call.1} parent=5 // pred_fallthru
        _
      %42 = shalt.err (0)
      %s44 = sshll.u32 %s35, 4
      %s45 = int_to_ptr.vmem [resolvable:$true] %s44
      %47 = dma.hbm_to_vmem [thread:$0]  %s34, 16, %s45, %s36
    $region6: #{tpu_custom_call.1} parent=1 // loop_footer
      %s17 = sadd.s32 1, %s13
    $region7: #{tpu_custom_call.1} parent=1 // loop_footer_branch
      %12 = sbr.rel target = $region3
    $region8: #{tpu_custom_call.1} parent=1 // loop_exit
      _
    loop: start=0, step=1, limit=8
    $region13: #{tpu_custom_call.1} parent=1 // loop_pre_header
      _
    $region14: #{tpu_custom_call.1} parent=1 // loop_header
      %s49 = sphi 0, %s53
      %p50 = scmp.ge.s32.totalorder %s49, 8
    $region15: #{tpu_custom_call.1} parent=1 // loop_header_branch
      %52 = sbr.rel (%p50) target = $region19
    $region16: #{tpu_custom_call.1} parent=1 // loop_body
      %s54 = sadd.s32 %s49, 8
      %p55 = scmp.lt.s32.totalorder %s49, 0
      %s56 = ssub.s32 0, %s49
      %s57 = scalar_select %p55, %s56, %s49
      %s58 = sand.u32 %s57, 7
      %s59 = ssub.s32 0, %s58
      %s60 = scalar_select %p55, %s59, %s58
      %p61 = scmp.ne.s32.totalorder %s60, 0
      %p62 = scmp.lt.s32.totalorder %s60, 0
      %p63 = pnand %p62, %p61
      %p64 = pneg %p63
      %s65 = sadd.s32 %s60, 8
      %s66 = scalar_select %p64, %s65, %s60
      %s67 = scalar_lea.sflag [#allocation2], %s66
      %s68 = smul.u32 1, 1
      %s69 = sshll.u32 %s68, 4
      %70 = dma.done %s67, %s69
      %s71 = smul.u32 0, 16
      %s72 = sadd.s32 %s71, %s54
      %s73 = sld [smem:[#allocation4 + %s72]]
      %p74 = scmp.lt.s32.totalorder %s54, 0
      %s75 = ssub.s32 0, %s54
      %s76 = scalar_select %p74, %s75, %s54
      %s77 = sand.u32 %s76, 7
      %s78 = ssub.s32 0, %s77
      %s79 = scalar_select %p74, %s78, %s77
      %p80 = scmp.ne.s32.totalorder %s79, 0
      %p81 = scmp.lt.s32.totalorder %s79, 0
      %p82 = pnand %p81, %p80
      %p83 = pneg %p82
      %s84 = sadd.s32 %s79, 8
      %s85 = scalar_select %p83, %s84, %s79
      %s86 = smul.addr %s73, 16
      %s87 = scalar_lea.hbm %s1, %s86
      %s88 = scalar_lea.vmem [#allocation5], %s54
      %s89 = scalar_lea.sflag [#allocation2], %s85
      // Predicated region
      $region20: #{tpu_custom_call.1} parent=16 // pred_check
        _
      $region21: #{tpu_custom_call.1} parent=16 // pred_check_branch
        %91 = sbr.rel target = $region23
      $region22: #{tpu_custom_call.1} parent=16 // pred_region
        %92 = sst [smem:[#allocation9]] [#allocation12]
        %93 = sst [smem:[#allocation10]] [#allocation11]
      $region23: #{tpu_custom_call.1} parent=16 // pred_fallthru
        _
      %95 = shalt.err (0)
      %s97 = sshll.u32 %s88, 4
      %s98 = int_to_ptr.vmem [resolvable:$true] %s97
      %100 = dma.hbm_to_vmem [thread:$0]  %s87, 16, %s98, %s89
    $region17: #{tpu_custom_call.1} parent=1 // loop_footer
      %s53 = sadd.s32 1, %s49
    $region18: #{tpu_custom_call.1} parent=1 // loop_footer_branch
      %48 = sbr.rel target = $region14
    $region19: #{tpu_custom_call.1} parent=1 // loop_exit
      _
    loop: start=0, step=1, limit=8
    $region24: #{tpu_custom_call.1} parent=1 // loop_pre_header
      _
    $region25: #{tpu_custom_call.1} parent=1 // loop_header
      %s102 = sphi 0, %s106
      %p103 = scmp.ge.s32.totalorder %s102, 8
    $region26: #{tpu_custom_call.1} parent=1 // loop_header_branch
      %105 = sbr.rel (%p103) target = $region30
    $region27: #{tpu_custom_call.1} parent=1 // loop_body
      %s107 = sadd.s32 %s102, 8
      %p108 = scmp.lt.s32.totalorder %s107, 0
      %s109 = ssub.s32 0, %s107
      %s110 = scalar_select %p108, %s109, %s107
      %s111 = sand.u32 %s110, 7
      %s112 = ssub.s32 0, %s111
      %s113 = scalar_select %p108, %s112, %s111
      %p114 = scmp.ne.s32.totalorder %s113, 0
      %p115 = scmp.lt.s32.totalorder %s113, 0
      %p116 = pnand %p115, %p114
      %p117 = pneg %p116
      %s118 = sadd.s32 %s113, 8
      %s119 = scalar_select %p117, %s118, %s113
      %s120 = scalar_lea.sflag [#allocation2], %s119
      %s121 = smul.u32 1, 1
      %s122 = sshll.u32 %s121, 4
      %123 = dma.done %s120, %s122
    $region28: #{tpu_custom_call.1} parent=1 // loop_footer
      %s106 = sadd.s32 1, %s102
    $region29: #{tpu_custom_call.1} parent=1 // loop_footer_branch
      %101 = sbr.rel target = $region25
    $region30: #{tpu_custom_call.1} parent=1 // loop_exit
      _
    // Predicated region
    $region31: #{tpu_custom_call.1} parent=1 // pred_check
      _
    $region32: #{tpu_custom_call.1} parent=1 // pred_check_branch
      %125 = sbr.rel (0) target = $region34
    $region33: #{tpu_custom_call.1} parent=1 // pred_region
      %s127 = ssub.s32 256, 256
      %128 = vsyncadd [#allocation6], %s127
      %s129 = sshll.u32 [#allocation5], 4
      %s130 = int_to_ptr.vmem [resolvable:$true] %s129
      %135 = dma.vmem_to_hbm [thread:$0]  %s130, 256, %s2, [#allocation6], 128, 128, 8
    $region34: #{tpu_custom_call.1} parent=1 // pred_fallthru
      _
    // Predicated region
    $region35: #{tpu_custom_call.1} parent=1 // pred_check
      _
    $region36: #{tpu_custom_call.1} parent=1 // pred_check_branch
      %137 = sbr.rel (0) target = $region38
    $region37: #{tpu_custom_call.1} parent=1 // pred_region
      %138 = dma.done [#allocation6], 256
    $region38: #{tpu_custom_call.1} parent=1 // pred_fallthru
      _
    %139 = vsyncpa [#allocation6], 1
  %140 = vsyncmov [#allocation2]
  %s141 = vpop.sfrf %140
  %p142 = scmp.eq.s32.totalorder %s141, 0
  %p143 = pneg %p142
  %145 = shalt.err (%p143)
  %s146 = scalar_lea.sflag [#allocation2], 1
  %147 = vsyncmov %s146
  %s148 = vpop.sfrf %147
  %p149 = scmp.eq.s32.totalorder %s148, 0
  %p150 = pneg %p149
  %152 = shalt.err (%p150)
  %s153 = scalar_lea.sflag [#allocation2], 2
  %154 = vsyncmov %s153
  %s155 = vpop.sfrf %154
  %p156 = scmp.eq.s32.totalorder %s155, 0
  %p157 = pneg %p156
  %159 = shalt.err (%p157)
  %s160 = scalar_lea.sflag [#allocation2], 3
  %161 = vsyncmov %s160
  %s162 = vpop.sfrf %161
  %p163 = scmp.eq.s32.totalorder %s162, 0
  %p164 = pneg %p163
  %166 = shalt.err (%p164)
  %s167 = scalar_lea.sflag [#allocation2], 4
  %168 = vsyncmov %s167
  %s169 = vpop.sfrf %168
  %p170 = scmp.eq.s32.totalorder %s169, 0
  %p171 = pneg %p170
  %173 = shalt.err (%p171)
  %s174 = scalar_lea.sflag [#allocation2], 5
  %175 = vsyncmov %s174
  %s176 = vpop.sfrf %175
  %p177 = scmp.eq.s32.totalorder %s176, 0
  %p178 = pneg %p177
  %180 = shalt.err (%p178)
  %s181 = scalar_lea.sflag [#allocation2], 6
  %182 = vsyncmov %s181
  %s183 = vpop.sfrf %182
  %p184 = scmp.eq.s32.totalorder %s183, 0
  %p185 = pneg %p184
  %187 = shalt.err (%p185)
  %s188 = scalar_lea.sflag [#allocation2], 7
  %189 = vsyncmov %s188
  %s190 = vpop.sfrf %189
  %p191 = scmp.eq.s32.totalorder %s190, 0
  %p192 = pneg %p191
  %194 = shalt.err (%p192)

</llo_original>
